<compile_context>
chip_gen: v7x
topology: tpu7x:2x2x1
jax: 0.10.0
libtpu: 0.0.40
codegen_flags: <defaults>
</compile_context>

<pallas_src>
import functools

import jax
import jax.numpy as jnp
import numpy as np
from jax import lax
from jax.experimental import pallas as pl
from jax.experimental.pallas import tpu as pltpu


def fps_kernel(x_ref, y_ref, z_ref, idx_ref, dist_ref, *, n, m):
    """x/y/z_ref, dist_ref: (R, 128) f32 in VMEM; idx_ref: (M,) int32 in SMEM."""
    r = x_ref.shape[0]

    # Flat point index of every (sublane, lane) slot, row-major (i = row*128+col).
    row_ids = lax.broadcasted_iota(jnp.int32, (r, 128), 0)
    col_ids = lax.broadcasted_iota(jnp.int32, (r, 128), 1)
    ids = row_ids * 128 + col_ids
    valid = ids < n

    # Running min-distance: 1e10 for valid points, -inf for padding slots so
    # they can never win the argmax.  (Scratch is NOT zero-initialized.)
    dist_ref[...] = jnp.where(valid, jnp.float32(1e10), jnp.float32(-jnp.inf))

    # First sampled point is always point 0 of the (single) segment.
    idx_ref[0] = jnp.int32(0)

    x = x_ref[...]
    y = y_ref[...]
    z = z_ref[...]

    # Coordinates of point 0 (row 0, lane 0) — static (1,1) slices.
    q0 = (x[0:1, 0:1], y[0:1, 0:1], z[0:1, 0:1])

    def body(j, q):
        qx, qy, qz = q                                   # (1,1) f32 each

        # Dense 3-row squared distance to the last selected point.
        dx = x - qx
        dy = y - qy
        dz = z - qz
        d = dx * dx + dy * dy + dz * dz                  # (R, 128)

        dist = jnp.minimum(dist_ref[...], d)
        dist_ref[...] = dist

        # argmax with first-occurrence tie break (matches np.argmax / pointops).
        maxval = jnp.max(dist)
        nxt = jnp.min(jnp.where(dist == maxval, ids, jnp.int32(2**30)))
        nxt = nxt.astype(jnp.int32)
        idx_ref[j] = nxt

        # Extract coordinates of the newly selected point with a one-hot mask
        # (exact: exactly one element matches, padding coords are zero anyway).
        sel = (ids == nxt).astype(jnp.float32)
        qx_n = jnp.sum(x * sel, keepdims=True)
        qy_n = jnp.sum(y * sel, keepdims=True)
        qz_n = jnp.sum(z * sel, keepdims=True)
        return (qx_n, qy_n, qz_n)

    lax.fori_loop(1, m, body, q0)


def fps_pallas(feats, stride=400):
    """feats: (N, C) float array, columns 0..2 are xyz. Returns (N//stride,) int32."""
    n = feats.shape[0]
    m = n // stride
    assert m >= 1, "need at least one sample (N // stride >= 1)"

    p = feats[:, :3].astype(jnp.float32)                  # (N, 3)

    # Dense layout: R rows of 128 lanes, R a multiple of 8 (full vregs).
    r = ((n + 1023) // 1024) * 8
    npad = r * 128

    coords = jnp.zeros((3, npad), jnp.float32).at[:, :n].set(p.T)
    xt = coords[0].reshape(r, 128)
    yt = coords[1].reshape(r, 128)
    zt = coords[2].reshape(r, 128)

    kernel = functools.partial(fps_kernel, n=n, m=m)

    # VMEM budget: 3 coord tiles + 1 dist scratch (f32) + slack.
    vmem_need = 4 * npad * 4 + (1 << 20)
    vmem_limit = int(max(vmem_need, 32 * 1024 * 1024))

    idx = pl.pallas_call(
        kernel,
        out_shape=jax.ShapeDtypeStruct((m,), jnp.int32),
        in_specs=[pl.BlockSpec(memory_space=pltpu.MemorySpace.VMEM)] * 3,
        out_specs=pl.BlockSpec(memory_space=pltpu.MemorySpace.SMEM),
        scratch_shapes=[pltpu.VMEM((r, 128), jnp.float32)],
        compiler_params=pltpu.CompilerParams(vmem_limit_bytes=vmem_limit),
    )(xt, yt, zt)
    return idx


def fps_reference(p_np, m):
    """Plain numpy FPS, mirrors pointops.furthestsampling semantics."""
    n = p_np.shape[0]
    dist = np.full(n, 1e10, dtype=np.float32)
    idx = np.zeros(m, dtype=np.int32)
    last = 0
    for j in range(1, m):
        d = ((p_np - p_np[last]) ** 2).sum(axis=1).astype(np.float32)
        dist = np.minimum(dist, d)
        last = int(np.argmax(dist))
        idx[j] = last
    return idx


if __name__ == "__main__":
    # Small, module-consistent shapes: N points, C = 3 coords + 3 feature dims.
    N, C = 512, 6
    stride = 64            # -> M = 8 sampled points
    key = jax.random.PRNGKey(0)
    feats = jax.random.normal(key, (N, C), dtype=jnp.float32)

    idx = fps_pallas(feats, stride=stride)
    idx = jax.block_until_ready(idx)

    ref = fps_reference(np.asarray(feats[:, :3], dtype=np.float32), N // stride)
    assert np.array_equal(np.asarray(idx), ref), (np.asarray(idx), ref)

    print("KERNEL_OK")
</pallas_src>

<mosaic_0001>
module attributes {stable_mosaic.version = 11 : i64} {
  func.func @fps_kernel(%arg0: memref<8x128xf32, #tpu.memory_space<vmem>>, %arg1: memref<8x128xf32, #tpu.memory_space<vmem>>, %arg2: memref<8x128xf32, #tpu.memory_space<vmem>>, %arg3: memref<8xi32, #tpu.memory_space<smem>>, %arg4: memref<8x128xf32, #tpu.memory_space<vmem>>) attributes {dimension_semantics = [], scalar_prefetch = 0 : i64, scratch_operands = 1 : i64, tpu.core_type = #tpu.core_type<tc>} {
    %0 = tpu.iota {dimensions = array<i32: 0>} : vector<8x128xi32>
    %1 = tpu.iota {dimensions = array<i32: 1>} : vector<8x128xi32>
    %c128_i32 = arith.constant 128 : i32
    %2 = vector.broadcast %c128_i32 : i32 to vector<8x128xi32>
    %3 = arith.muli %0, %2 : vector<8x128xi32>
    %4 = arith.addi %3, %1 : vector<8x128xi32>
    %c512_i32 = arith.constant 512 : i32
    %5 = vector.broadcast %c512_i32 : i32 to vector<8x128xi32>
    %6 = arith.cmpi slt, %4, %5 : vector<8x128xi32>
    %cst = arith.constant 1.000000e+10 : f32
    %cst_0 = arith.constant 0xFF800000 : f32
    %7 = vector.broadcast %cst : f32 to vector<8x128xf32>
    %8 = vector.broadcast %cst_0 : f32 to vector<8x128xf32>
    %9 = arith.select %6, %7, %8 : vector<8x128xi1>, vector<8x128xf32>
    %c0 = arith.constant 0 : index
    %c0_1 = arith.constant 0 : index
    %10 = vector.load %arg4[%c0, %c0_1] : memref<8x128xf32, #tpu.memory_space<vmem>>, vector<8x128xf32>
    tpu.vector_store %arg4[%c0, %c0_1], %9 {strides = array<i32>} : memref<8x128xf32, #tpu.memory_space<vmem>>, vector<8x128xf32>,
    %c0_i32 = arith.constant 0 : i32
    %c0_2 = arith.constant 0 : index
    %11 = memref.load %arg3[%c0_2] : memref<8xi32, #tpu.memory_space<smem>>
    memref.store %c0_i32, %arg3[%c0_2] : memref<8xi32, #tpu.memory_space<smem>>
    %c0_3 = arith.constant 0 : index
    %c0_4 = arith.constant 0 : index
    %12 = vector.load %arg0[%c0_3, %c0_4] : memref<8x128xf32, #tpu.memory_space<vmem>>, vector<8x128xf32>
    %c0_5 = arith.constant 0 : index
    %c0_6 = arith.constant 0 : index
    %13 = vector.load %arg1[%c0_5, %c0_6] : memref<8x128xf32, #tpu.memory_space<vmem>>, vector<8x128xf32>
    %c0_7 = arith.constant 0 : index
    %c0_8 = arith.constant 0 : index
    %14 = vector.load %arg2[%c0_7, %c0_8] : memref<8x128xf32, #tpu.memory_space<vmem>>, vector<8x128xf32>
    %15 = vector.extract_strided_slice %12 {offsets = [0, 0], sizes = [1, 1], strides = [1, 1]} : vector<8x128xf32> to vector<1x1xf32>
    %16 = vector.extract_strided_slice %13 {offsets = [0, 0], sizes = [1, 1], strides = [1, 1]} : vector<8x128xf32> to vector<1x1xf32>
    %17 = vector.extract_strided_slice %14 {offsets = [0, 0], sizes = [1, 1], strides = [1, 1]} : vector<8x128xf32> to vector<1x1xf32>
    %c1_i32 = arith.constant 1 : i32
    %c7_i32 = arith.constant 7 : i32
    %18 = arith.addi %c1_i32, %c7_i32 : i32
    %c1_i32_9 = arith.constant 1 : i32
    %19:3 = scf.for %arg5 = %c1_i32 to %18 step %c1_i32_9 iter_args(%arg6 = %15, %arg7 = %16, %arg8 = %17) -> (vector<1x1xf32>, vector<1x1xf32>, vector<1x1xf32>)  : i32 {
      %20 = vector.broadcast %arg6 : vector<1x1xf32> to vector<8x128xf32>
      %21 = arith.subf %12, %20 : vector<8x128xf32>
      %22 = vector.broadcast %arg7 : vector<1x1xf32> to vector<8x128xf32>
      %23 = arith.subf %13, %22 : vector<8x128xf32>
      %24 = vector.broadcast %arg8 : vector<1x1xf32> to vector<8x128xf32>
      %25 = arith.subf %14, %24 : vector<8x128xf32>
      %26 = arith.mulf %21, %21 : vector<8x128xf32>
      %27 = arith.mulf %23, %23 : vector<8x128xf32>
      %28 = arith.addf %26, %27 : vector<8x128xf32>
      %29 = arith.mulf %25, %25 : vector<8x128xf32>
      %30 = arith.addf %28, %29 : vector<8x128xf32>
      %c0_11 = arith.constant 0 : index
      %c0_12 = arith.constant 0 : index
      %31 = vector.load %arg4[%c0_11, %c0_12] : memref<8x128xf32, #tpu.memory_space<vmem>>, vector<8x128xf32>
      %32 = arith.minimumf %31, %30 : vector<8x128xf32>
      %c0_13 = arith.constant 0 : index
      %c0_14 = arith.constant 0 : index
      %33 = vector.load %arg4[%c0_13, %c0_14] : memref<8x128xf32, #tpu.memory_space<vmem>>, vector<8x128xf32>
      tpu.vector_store %arg4[%c0_13, %c0_14], %32 {strides = array<i32>} : memref<8x128xf32, #tpu.memory_space<vmem>>, vector<8x128xf32>,
      %34 = vector.shape_cast %32 : vector<8x128xf32> to vector<1x8x128xf32>
      %cst_15 = arith.constant dense<0xFF800000> : vector<1xf32>
      %35 = vector.multi_reduction <maximumf>, %34, %cst_15 [1, 2] : vector<1x8x128xf32> to vector<1xf32>
      %36 = vector.shape_cast %35 : vector<1xf32> to vector<1x1x1xf32>
      %37 = vector.extract %36[0, 0, 0] : f32 from vector<1x1x1xf32>
      %38 = vector.broadcast %37 : f32 to vector<8x128xf32>
      %39 = arith.cmpf oeq, %32, %38 : vector<8x128xf32>
      %c1073741824_i32 = arith.constant 1073741824 : i32
      %40 = vector.broadcast %c1073741824_i32 : i32 to vector<8x128xi32>
      %41 = arith.select %39, %4, %40 : vector<8x128xi1>, vector<8x128xi32>
      %42 = vector.shape_cast %41 : vector<8x128xi32> to vector<1x8x128xi32>
      %cst_16 = arith.constant dense<2147483647> : vector<1xi32>
      %43 = vector.multi_reduction <minsi>, %42, %cst_16 [1, 2] : vector<1x8x128xi32> to vector<1xi32>
      %44 = vector.shape_cast %43 : vector<1xi32> to vector<1x1x1xi32>
      %45 = vector.extract %44[0, 0, 0] : i32 from vector<1x1x1xi32>
      %46 = arith.index_cast %arg5 : i32 to index
      %47 = memref.load %arg3[%46] : memref<8xi32, #tpu.memory_space<smem>>
      memref.store %45, %arg3[%46] : memref<8xi32, #tpu.memory_space<smem>>
      %48 = vector.broadcast %45 : i32 to vector<8x128xi32>
      %49 = arith.cmpi eq, %4, %48 : vector<8x128xi32>
      %50 = arith.extui %49 : vector<8x128xi1> to vector<8x128xi32>
      %51 = arith.sitofp %50 : vector<8x128xi32> to vector<8x128xf32>
      %52 = arith.mulf %12, %51 : vector<8x128xf32>
      %53 = vector.shape_cast %52 : vector<8x128xf32> to vector<1x8x128xf32>
      %cst_17 = arith.constant dense<0.000000e+00> : vector<1xf32>
      %54 = vector.multi_reduction <add>, %53, %cst_17 [1, 2] : vector<1x8x128xf32> to vector<1xf32>
      %55 = vector.shape_cast %54 : vector<1xf32> to vector<1x1x1xf32>
      %56 = vector.extract %55[0, 0, 0] : f32 from vector<1x1x1xf32>
      %57 = vector.broadcast %56 : f32 to vector<1x1xf32>
      %58 = arith.mulf %13, %51 : vector<8x128xf32>
      %59 = vector.shape_cast %58 : vector<8x128xf32> to vector<1x8x128xf32>
      %cst_18 = arith.constant dense<0.000000e+00> : vector<1xf32>
      %60 = vector.multi_reduction <add>, %59, %cst_18 [1, 2] : vector<1x8x128xf32> to vector<1xf32>
      %61 = vector.shape_cast %60 : vector<1xf32> to vector<1x1x1xf32>
      %62 = vector.extract %61[0, 0, 0] : f32 from vector<1x1x1xf32>
      %63 = vector.broadcast %62 : f32 to vector<1x1xf32>
      %64 = arith.mulf %14, %51 : vector<8x128xf32>
      %65 = vector.shape_cast %64 : vector<8x128xf32> to vector<1x8x128xf32>
      %cst_19 = arith.constant dense<0.000000e+00> : vector<1xf32>
      %66 = vector.multi_reduction <add>, %65, %cst_19 [1, 2] : vector<1x8x128xf32> to vector<1xf32>
      %67 = vector.shape_cast %66 : vector<1xf32> to vector<1x1x1xf32>
      %68 = vector.extract %67[0, 0, 0] : f32 from vector<1x1x1xf32>
      %69 = vector.broadcast %68 : f32 to vector<1x1xf32>
      scf.yield %57, %63, %69 : vector<1x1xf32>, vector<1x1xf32>, vector<1x1xf32>
    }
    %c7_i32_10 = arith.constant 7 : i32
    return
  }
}

</mosaic_0001>

<llo_original>
// kernel: tpu_custom_call.1
$region0: #{tpu_custom_call.1}
  #allocation0 [shape = 'u32[]', space=smem, size = 0x4, offset = 0x4, fixed_abs, tag = 'smem constant byte address 0x4 - core index']
  #allocation1 [shape = 'u32[144,128]{1,0:T(1,128)}', space=vmem, size = 0x12000, scoped, tag = 'internal scratch']
  #allocation2 [shape = 'f32[8,128]{1,0:T(8,128)}', space=vmem, size = 0x1000, scoped, tag = 'scratch operand']
  %s0 = inlined_call_operand.hbm [shape: f32[8,128], index: 0, kind: input, shape index: {}]
  %s1 = inlined_call_operand.hbm [shape: f32[8,128], index: 1, kind: input, shape index: {}]
  %s2 = inlined_call_operand.hbm [shape: f32[8,128], index: 2, kind: input, shape index: {}]
  %s3 = inlined_call_operand.hbm [shape: s32[8], index: 3, kind: output, shape index: {}]
  %s4 = sld [smem:[#allocation0]]
  $region41: #{tpu_custom_call.1} parent=0
    _
  %s6 = ssub.s32 1, %s4
  %s7 = scalar_select 0, %s6, %s4
  $region1: #{tpu_custom_call.1} parent=0
    #allocation3 [shape = 'u8[4096]{0}', space=vmem, size = 0x1000, scoped, tag = 'input window, operand 0, single buffered']
    #allocation4 [shape = 's32[1]{0}', space=sflag, size = 0x4, scoped, tag = 'scoped memory for tpu_custom_call.1']
    #allocation5 [shape = 's32[1]{0}', space=sflag, size = 0x4, scoped, tag = 'scoped memory for tpu_custom_call.1']
    #allocation6 [shape = 'u8[4096]{0}', space=vmem, size = 0x1000, scoped, tag = 'input window, operand 1, single buffered']
    #allocation7 [shape = 's32[1]{0}', space=sflag, size = 0x4, scoped, tag = 'scoped memory for tpu_custom_call.1']
    #allocation8 [shape = 'u8[4096]{0}', space=vmem, size = 0x1000, scoped, tag = 'input window, operand 2, single buffered']
    #allocation9 [shape = 'u8[512]{0}', space=smem, size = 0x200, scoped, tag = 'output window, operand 0, single buffered']
    %8 = vsyncpa [#allocation4], 0
    %9 = vsyncpa [#allocation7], 0
    %10 = vsyncpa [#allocation5], 0
    // Predicated region
    $region2: #{tpu_custom_call.1} parent=1 // pred_check
      _
    $region3: #{tpu_custom_call.1} parent=1 // pred_check_branch
      %12 = sbr.rel (0) target = $region5
    $region4: #{tpu_custom_call.1} parent=1 // pred_region
      %s14 = ssub.s32 128, 128
      %15 = vsyncadd [#allocation4], %s14
      %s17 = sshll.u32 [#allocation3], 4
      %s18 = int_to_ptr.vmem [resolvable:$true] %s17
      %20 = dma.hbm_to_vmem [thread:$0]  %s0, 128, %s18, [#allocation4]
    $region5: #{tpu_custom_call.1} parent=1 // pred_fallthru
      _
    // Predicated region
    $region6: #{tpu_custom_call.1} parent=1 // pred_check
      _
    $region7: #{tpu_custom_call.1} parent=1 // pred_check_branch
      %22 = sbr.rel (0) target = $region9
    $region8: #{tpu_custom_call.1} parent=1 // pred_region
      %s24 = ssub.s32 128, 128
      %25 = vsyncadd [#allocation7], %s24
      %s27 = sshll.u32 [#allocation6], 4
      %s28 = int_to_ptr.vmem [resolvable:$true] %s27
      %30 = dma.hbm_to_vmem [thread:$0]  %s1, 128, %s28, [#allocation7]
    $region9: #{tpu_custom_call.1} parent=1 // pred_fallthru
      _
    // Predicated region
    $region10: #{tpu_custom_call.1} parent=1 // pred_check
      _
    $region11: #{tpu_custom_call.1} parent=1 // pred_check_branch
      %32 = sbr.rel (0) target = $region13
    $region12: #{tpu_custom_call.1} parent=1 // pred_region
      %s34 = ssub.s32 128, 128
      %35 = vsyncadd [#allocation7], %s34
      %s37 = sshll.u32 [#allocation8], 4
      %s38 = int_to_ptr.vmem [resolvable:$true] %s37
      %40 = dma.hbm_to_vmem [thread:$0]  %s2, 128, %s38, [#allocation7]
    $region13: #{tpu_custom_call.1} parent=1 // pred_fallthru
      _
    // Predicated region
    $region14: #{tpu_custom_call.1} parent=1 // pred_check
      _
    $region15: #{tpu_custom_call.1} parent=1 // pred_check_branch
      %42 = sbr.rel (0) target = $region17
    $region16: #{tpu_custom_call.1} parent=1 // pred_region
      %43 = dma.done [#allocation4], 128
    $region17: #{tpu_custom_call.1} parent=1 // pred_fallthru
      _
    // Predicated region
    $region18: #{tpu_custom_call.1} parent=1 // pred_check
      _
    $region19: #{tpu_custom_call.1} parent=1 // pred_check_branch
      %45 = sbr.rel (0) target = $region21
    $region20: #{tpu_custom_call.1} parent=1 // pred_region
      %46 = dma.done [#allocation7], 128
    $region21: #{tpu_custom_call.1} parent=1 // pred_fallthru
      _
    // Predicated region
    $region22: #{tpu_custom_call.1} parent=1 // pred_check
      _
    $region23: #{tpu_custom_call.1} parent=1 // pred_check_branch
      %48 = sbr.rel (0) target = $region25
    $region24: #{tpu_custom_call.1} parent=1 // pred_region
      %49 = dma.done [#allocation7], 128
    $region25: #{tpu_custom_call.1} parent=1 // pred_fallthru
      _
    %v50 = vlaneseq
    %v51 = vshrl.u32 %v50, 7
    %v52 = vlaneseq
    %v53 = vand.u32 %v52, 127
    %v54 = vmul.u32 %v51, 128
    %v55 = vadd.s32 %v54, %v53
    %vm56 = vcmp.lt.s32.totalorder %v55, 512
    %v57 = vsel %vm56, 1e+10, -inf
    %58 = vst [vmem:[#allocation2] sm:$0xff] %v57
    %s59 = scalar_lea.smem [#allocation9], 0
    %60 = sst [smem:[%s59]] 0
    %v61 = vld [vmem:[#allocation3] sm:$0xff]
    %v62 = vld [vmem:[#allocation6] sm:$0xff]
    %v63 = vld [vmem:[#allocation8] sm:$0xff]
    loop: start=1, step=1, limit=8
    $region26: #{tpu_custom_call.1} parent=1 // loop_pre_header
      _
    $region27: #{tpu_custom_call.1} parent=1 // loop_header
      %s65 = sphi 1, %s69
      %p66 = scmp.ge.s32.totalorder %s65, 8
      %v70 = vphi %v61, %v148
      %v71 = vphi %v62, %v159
      %v72 = vphi %v63, %v170
    $region28: #{tpu_custom_call.1} parent=1 // loop_header_branch
      %68 = sbr.rel (%p66) target = $region32
    $region29: #{tpu_custom_call.1} parent=1 // loop_body
      %s74 = vtos %v70
      %v75 = vstv %s74
      %v77 = vsub.f32 %v61, %v75
      %s79 = vtos %v71
      %v80 = vstv %s79
      %v82 = vsub.f32 %v62, %v80
      %s84 = vtos %v72
      %v85 = vstv %s84
      %v87 = vsub.f32 %v63, %v85
      %v88 = vmul.f32 %v77, %v77
      %v89 = vmul.f32 %v82, %v82
      %v90 = vadd.f32 %v88, %v89
      %v91 = vmul.f32 %v87, %v87
      %v92 = vadd.f32 %v90, %v91
      %v93 = vld [vmem:[#allocation2] sm:$0xff]
      %v94 = vmin.f32 %v93, %v92
      %95 = vst [vmem:[#allocation2] sm:$0xff] %v94
      %96 = vmax.xlane.f32.xlu0 %v94
      %v97 = vpop.xlane.xlu0 %96
      %v98 = vrot.slane %v97, 4
      %v99 = vmax.f32 %v97, %v98
      %v100 = vrot.slane %v99, 2
      %v101 = vmax.f32 %v99, %v100
      %v102 = vrot.slane %v101, 1
      %v103 = vmax.f32 %v101, %v102
      %s104 = vtos %v103
      %v105 = vstv %s104
      %vm106 = vcmp.eq.f32.partialorder %v94, %v105
      %v107 = vsel %vm106, %v55, 1073741824
      %v108 = vand.u32 %v107, 65535
      %v109 = vshra.s32 %v107, 16
      %v110 = vcvt.s32.f32 %v108
      %v111 = vcvt.s32.f32 %v109
      %112 = vmin.xlane.f32.xlu0 %v111
      %v113 = vpop.xlane.xlu0 %112
      %vm114 = vcmp.eq.f32.partialorder %v111, %v113
      %v115 = vsel %vm114, %v110, inf
      %116 = vmin.xlane.f32.xlu0 %v115
      %v117 = vpop.xlane.xlu0 %116
      %v118 = vcvt.f32.s32 %v117
      %v119 = vcvt.f32.s32 %v113
      %v120 = vshll.u32 %v119, 16
      %v121 = vadd.s32 %v120, %v118
      %v122 = vrot.slane %v121, 4
      %vm123 = vcmp.lt.s32.totalorder %v121, %v122
      %v124 = vsel %vm123, %v121, %v122
      %v125 = vrot.slane %v124, 2
      %vm126 = vcmp.lt.s32.totalorder %v124, %v125
      %v127 = vsel %vm126, %v124, %v125
      %v128 = vrot.slane %v127, 1
      %vm129 = vcmp.lt.s32.totalorder %v127, %v128
      %v130 = vsel %vm129, %v127, %v128
      %s131 = vtos %v130
      %s132 = scalar_lea.smem [#allocation9], %s65
      %133 = sst [smem:[%s132]] %s131
      %v134 = vstv %s131
      %vm135 = vcmp.eq.s32.totalorder %v55, %v134
      %v136 = vsel %vm135, 1, 0
      %v137 = vcvt.s32.f32 %v136
      %v138 = vmul.f32 %v61, %v137
      %139 = vadd.xlane.f32.xlu0 %v138
      %v140 = vpop.xlane.xlu0 %139
      %v141 = vrot.slane %v140, 4
      %v142 = vadd.f32 %v140, %v141
      %v143 = vrot.slane %v142, 2
      %v144 = vadd.f32 %v142, %v143
      %v145 = vrot.slane %v144, 1
      %v146 = vadd.f32 %v144, %v145
      %s147 = vtos %v146
      %v148 = vstv %s147
      %v149 = vmul.f32 %v62, %v137
      %150 = vadd.xlane.f32.xlu0 %v149
      %v151 = vpop.xlane.xlu0 %150
      %v152 = vrot.slane %v151, 4
      %v153 = vadd.f32 %v151, %v152
      %v154 = vrot.slane %v153, 2
      %v155 = vadd.f32 %v153, %v154
      %v156 = vrot.slane %v155, 1
      %v157 = vadd.f32 %v155, %v156
      %s158 = vtos %v157
      %v159 = vstv %s158
      %v160 = vmul.f32 %v63, %v137
      %161 = vadd.xlane.f32.xlu0 %v160
      %v162 = vpop.xlane.xlu0 %161
      %v163 = vrot.slane %v162, 4
      %v164 = vadd.f32 %v162, %v163
      %v165 = vrot.slane %v164, 2
      %v166 = vadd.f32 %v164, %v165
      %v167 = vrot.slane %v166, 1
      %v168 = vadd.f32 %v166, %v167
      %s169 = vtos %v168
      %v170 = vstv %s169
    $region30: #{tpu_custom_call.1} parent=1 // loop_footer
      %s69 = sadd.s32 1, %s65
    $region31: #{tpu_custom_call.1} parent=1 // loop_footer_branch
      %64 = sbr.rel target = $region27
    $region32: #{tpu_custom_call.1} parent=1 // loop_exit
      _
    // Predicated region
    $region33: #{tpu_custom_call.1} parent=1 // pred_check
      _
    $region34: #{tpu_custom_call.1} parent=1 // pred_check_branch
      %172 = sbr.rel (0) target = $region36
    $region35: #{tpu_custom_call.1} parent=1 // pred_region
      %s174 = ssub.s32 16, 16
      %175 = vsyncadd [#allocation5], %s174
      %178 = dma.smem_to_hbm [#allocation9], 16, %s3, [#allocation5]
    $region36: #{tpu_custom_call.1} parent=1 // pred_fallthru
      _
    // Predicated region
    $region37: #{tpu_custom_call.1} parent=1 // pred_check
      _
    $region38: #{tpu_custom_call.1} parent=1 // pred_check_branch
      %180 = sbr.rel (0) target = $region40
    $region39: #{tpu_custom_call.1} parent=1 // pred_region
      %181 = dma.done [#allocation5], 16
    $region40: #{tpu_custom_call.1} parent=1 // pred_fallthru
      _
    %182 = sfence
    %183 = vsyncpa [#allocation4], 1
    %184 = vsyncpa [#allocation7], 1
    %185 = vsyncpa [#allocation5], 1

</llo_original>
